<compile_context>
chip_gen: v5e
topology: v5e:2x2
jax: 0.10.0
libtpu: 0.0.40
codegen_flags: <defaults>
</compile_context>

<pallas_src>
import jax
import jax.numpy as jnp
from jax.experimental import pallas as pl
from jax.experimental.pallas import tpu as pltpu

# ----- small synthetic BERT config (toy sizes, consistent with the module) -----
HIDDEN = 32          # config.hidden_size
INTER = 64           # config.intermediate_size
EPS = 1e-12          # config.layer_norm_eps
INIT_RANGE = 0.02


# ---------------- fused BertOutput kernel ----------------
def bert_output_kernel(h_ref, x_ref, w_ref, p_ref, o_ref):
    # Dense: (tm, INTER)bf16 @ (INTER, HIDDEN)bf16 on the MXU, f32 accumulation.
    y = jnp.dot(h_ref[...], w_ref[...], preferred_element_type=jnp.float32)

    # Dropout is identity at inference.

    # Bias + residual add in f32 (p_ref row 0 = dense bias).
    z = y + p_ref[0:1, :] + x_ref[...]

    # Single-pass LayerNorm statistics: sum(z) and sum(z*z) are independent
    # reductions (overlap on the XLU) instead of the serial mean->sq->mean chain.
    # Note: padded tail rows (fallback path only) give var=0 -> finite output,
    # which is discarded by the wrapper.
    m1 = jnp.mean(z, axis=-1, keepdims=True)
    m2 = jnp.mean(z * z, axis=-1, keepdims=True)
    var = m2 - m1 * m1
    inv = jax.lax.rsqrt(var + EPS)           # EUP rsqrt
    # gamma = p_ref row 1, beta = p_ref row 2; cast to bf16 only at the store.
    o_ref[...] = ((z - m1) * inv * p_ref[1:2, :] + p_ref[2:3, :]).astype(o_ref.dtype)


def _pick_tm(M, block_rows):
    """Largest row tile <= block_rows that divides M (multiple of 8 unless tm==M),
    preferring one that yields >= 2 grid blocks (v7x second TensorCore)."""
    best = None
    for tm in range(min(block_rows, M), 0, -1):
        if M % tm == 0 and (tm % 8 == 0 or tm == M):
            if best is None:
                best = tm
            if M // tm >= 2:
                return tm
    if best is not None:
        return best
    return min(block_rows, M)   # fallback: will require padding


def bert_output(hidden_states, input_tensor, w, b, gamma, beta,
                *, block_rows=256, out_dtype=jnp.bfloat16, vmem_limit_bytes=None):
    """hidden_states: (..., INTER); input_tensor: (..., HIDDEN) -> (..., HIDDEN)."""
    out_shape = input_tensor.shape
    I = hidden_states.shape[-1]
    H = input_tensor.shape[-1]

    # Flatten batch*seq into one row dimension: one grid axis over rows, no
    # per-example grid loop.
    # hidden_states is the dominant HBM stream -> ship it as bf16 (at production
    # the previous layer would already emit bf16, making this cast a no-op).
    h2 = hidden_states.reshape(-1, I).astype(jnp.bfloat16)
    # Residual stays f32 so the LN/residual math is exactly f32.
    x2 = input_tensor.reshape(-1, H).astype(jnp.float32)
    M = h2.shape[0]

    tm = _pick_tm(M, block_rows)
    n_blocks = pl.cdiv(M, tm)
    Mp = n_blocks * tm
    if Mp != M:  # rare fallback; avoided whenever a divisor-of-M tile exists
        h2 = jnp.pad(h2, ((0, Mp - M), (0, 0)))
        x2 = jnp.pad(x2, ((0, Mp - M), (0, 0)))

    w_bf16 = w.astype(jnp.bfloat16)            # bf16 weight: half the resident bytes
    # Pack bias / gamma / beta into one (3, H) constant input (one DMA descriptor).
    params = jnp.stack([b.astype(jnp.float32),
                        gamma.astype(jnp.float32),
                        beta.astype(jnp.float32)], axis=0)

    cp_kwargs = dict(dimension_semantics=("parallel",))
    if vmem_limit_bytes is not None:
        # Needed at production shapes (tm=512..1024, INTER=3072): default scoped
        # VMEM is 16 MiB (v5e) / 32 MiB (v6e, v7x). Re-derive for v7x's 64 MiB.
        cp_kwargs["vmem_limit_bytes"] = vmem_limit_bytes

    out = pl.pallas_call(
        bert_output_kernel,
        out_shape=jax.ShapeDtypeStruct((Mp, H), out_dtype),
        grid=(n_blocks,),
        in_specs=[
            pl.BlockSpec((tm, I), lambda i: (i, 0)),   # hidden_states rows (bf16)
            pl.BlockSpec((tm, H), lambda i: (i, 0)),   # residual rows (f32)
            pl.BlockSpec((I, H), lambda i: (0, 0)),    # dense weight, resident
            pl.BlockSpec((3, H), lambda i: (0, 0)),    # [bias; gamma; beta], resident
        ],
        out_specs=pl.BlockSpec((tm, H), lambda i: (i, 0)),
        compiler_params=pltpu.CompilerParams(**cp_kwargs),
    )(h2, x2, w_bf16, params)

    if Mp != M:
        out = out[:M]
    return out.reshape(out_shape)


# ---------------- pure-JAX reference (f32) for a sanity check ----------------
def bert_output_ref(hidden_states, input_tensor, w, b, gamma, beta):
    y = hidden_states @ w + b.reshape(1, 1, -1)
    z = y + input_tensor
    mu = jnp.mean(z, axis=-1, keepdims=True)
    var = jnp.mean(jnp.square(z - mu), axis=-1, keepdims=True)
    return (z - mu) * jax.lax.rsqrt(var + EPS) * gamma.reshape(1, 1, -1) \
        + beta.reshape(1, 1, -1)


if __name__ == "__main__":
    key = jax.random.PRNGKey(0)
    k1, k2, k3, k4 = jax.random.split(key, 4)

    B, S = 2, 8
    hidden_states = INIT_RANGE * jax.random.normal(k1, (B, S, INTER), jnp.float32)
    input_tensor = INIT_RANGE * jax.random.normal(k2, (B, S, HIDDEN), jnp.float32)
    w = INIT_RANGE * jax.random.normal(k3, (INTER, HIDDEN), jnp.float32)
    b = INIT_RANGE * jax.random.normal(k4, (HIDDEN,), jnp.float32)
    gamma = jnp.ones((HIDDEN,), jnp.float32)
    beta = jnp.zeros((HIDDEN,), jnp.float32)

    out = bert_output(hidden_states, input_tensor, w, b, gamma, beta)
    jax.block_until_ready(out)

    assert out.shape == (B, S, HIDDEN)
    assert out.dtype == jnp.bfloat16
    ref = bert_output_ref(hidden_states, input_tensor, w, b, gamma, beta)
    # bf16 matmul operands + bf16 output vs f32 reference: loose tolerance on purpose.
    assert bool(jnp.allclose(out.astype(jnp.float32), ref, rtol=2e-2, atol=2e-2)), \
        "mismatch vs reference"

    print("KERNEL_OK")
</pallas_src>

<mosaic_0001>
module attributes {stable_mosaic.version = 11 : i64} {
  func.func @bert_output_kernel(%arg0: i32, %arg1: memref<8x64xbf16, #tpu.memory_space<vmem>>, %arg2: memref<8x32xf32, #tpu.memory_space<vmem>>, %arg3: memref<64x32xbf16, #tpu.memory_space<vmem>>, %arg4: memref<3x32xf32, #tpu.memory_space<vmem>>, %arg5: memref<8x32xbf16, #tpu.memory_space<vmem>>) attributes {dimension_semantics = [#tpu.dimension_semantics<parallel>], iteration_bounds = array<i64: 2>, scalar_prefetch = 0 : i64, scratch_operands = 0 : i64, tpu.core_type = #tpu.core_type<tc>, window_params = [{transform_indices = @transform_0, window_bounds = array<i64: 8, 64>}, {transform_indices = @transform_1, window_bounds = array<i64: 8, 32>}, {pipeline_mode = #tpu.pipeline_mode<synchronous>, transform_indices = @transform_2, window_bounds = array<i64: 64, 32>}, {pipeline_mode = #tpu.pipeline_mode<synchronous>, transform_indices = @transform_3, window_bounds = array<i64: 3, 32>}, {transform_indices = @transform_4, window_bounds = array<i64: 8, 32>}]} {
    %c0 = arith.constant 0 : index
    %c0_0 = arith.constant 0 : index
    %0 = vector.load %arg1[%c0, %c0_0] : memref<8x64xbf16, #tpu.memory_space<vmem>>, vector<8x64xbf16>
    %c0_1 = arith.constant 0 : index
    %c0_2 = arith.constant 0 : index
    %1 = vector.load %arg3[%c0_1, %c0_2] : memref<64x32xbf16, #tpu.memory_space<vmem>>, vector<64x32xbf16>
    %cst = arith.constant dense<0.000000e+00> : vector<8x32xf32>
    %2 = tpu.matmul %0, %1, %cst {dimension_numbers = #tpu.dot_dimension_numbers<[1], [0], [0], [1], [0, 0, 1, 1], [], []>} : vector<8x64xbf16>, vector<64x32xbf16>, vector<8x32xf32> -> vector<8x32xf32>
    %c0_3 = arith.constant 0 : index
    %c0_4 = arith.constant 0 : index
    %3 = vector.load %arg4[%c0_3, %c0_4] : memref<3x32xf32, #tpu.memory_space<vmem>>, vector<1x32xf32>
    %4 = vector.broadcast %3 : vector<1x32xf32> to vector<8x32xf32>
    %5 = arith.addf %2, %4 : vector<8x32xf32>
    %c0_5 = arith.constant 0 : index
    %c0_6 = arith.constant 0 : index
    %6 = vector.load %arg2[%c0_5, %c0_6] : memref<8x32xf32, #tpu.memory_space<vmem>>, vector<8x32xf32>
    %7 = arith.addf %5, %6 : vector<8x32xf32>
    %cst_7 = arith.constant dense<0.000000e+00> : vector<8xf32>
    %8 = vector.multi_reduction <add>, %7, %cst_7 [1] : vector<8x32xf32> to vector<8xf32>
    %9 = vector.shape_cast %8 : vector<8xf32> to vector<8x1xf32>
    %cst_8 = arith.constant 3.200000e+01 : f32
    %10 = vector.broadcast %cst_8 : f32 to vector<8x1xf32>
    %11 = arith.divf %9, %10 : vector<8x1xf32>
    %12 = arith.mulf %7, %7 : vector<8x32xf32>
    %cst_9 = arith.constant dense<0.000000e+00> : vector<8xf32>
    %13 = vector.multi_reduction <add>, %12, %cst_9 [1] : vector<8x32xf32> to vector<8xf32>
    %14 = vector.shape_cast %13 : vector<8xf32> to vector<8x1xf32>
    %cst_10 = arith.constant 3.200000e+01 : f32
    %15 = vector.broadcast %cst_10 : f32 to vector<8x1xf32>
    %16 = arith.divf %14, %15 : vector<8x1xf32>
    %17 = arith.mulf %11, %11 : vector<8x1xf32>
    %18 = arith.subf %16, %17 : vector<8x1xf32>
    %cst_11 = arith.constant 9.99999996E-13 : f32
    %19 = vector.broadcast %cst_11 : f32 to vector<8x1xf32>
    %20 = arith.addf %18, %19 : vector<8x1xf32>
    %21 = math.rsqrt %20 : vector<8x1xf32>
    %22 = vector.broadcast %11 : vector<8x1xf32> to vector<8x32xf32>
    %23 = arith.subf %7, %22 : vector<8x32xf32>
    %24 = vector.broadcast %21 : vector<8x1xf32> to vector<8x32xf32>
    %25 = arith.mulf %23, %24 : vector<8x32xf32>
    %c1 = arith.constant 1 : index
    %c0_12 = arith.constant 0 : index
    %26 = vector.load %arg4[%c1, %c0_12] : memref<3x32xf32, #tpu.memory_space<vmem>>, vector<1x32xf32>
    %27 = vector.broadcast %26 : vector<1x32xf32> to vector<8x32xf32>
    %28 = arith.mulf %25, %27 : vector<8x32xf32>
    %c2 = arith.constant 2 : index
    %c0_13 = arith.constant 0 : index
    %29 = vector.load %arg4[%c2, %c0_13] : memref<3x32xf32, #tpu.memory_space<vmem>>, vector<1x32xf32>
    %30 = vector.broadcast %29 : vector<1x32xf32> to vector<8x32xf32>
    %31 = arith.addf %28, %30 : vector<8x32xf32>
    %32 = arith.truncf %31 : vector<8x32xf32> to vector<8x32xbf16>
    %c0_14 = arith.constant 0 : index
    %c0_15 = arith.constant 0 : index
    %33 = vector.load %arg5[%c0_14, %c0_15] : memref<8x32xbf16, #tpu.memory_space<vmem>>, vector<8x32xbf16>
    tpu.vector_store %arg5[%c0_14, %c0_15], %32 {strides = array<i32>} : memref<8x32xbf16, #tpu.memory_space<vmem>>, vector<8x32xbf16>,
    return
  }
  func.func @transform_0(%arg0: i32) -> (i32, i32) {
    %c0_i32 = arith.constant 0 : i32
    %c0_i32_0 = arith.constant 0 : i32
    return %arg0, %c0_i32 : i32, i32
  }
  func.func @transform_1(%arg0: i32) -> (i32, i32) {
    %c0_i32 = arith.constant 0 : i32
    %c0_i32_0 = arith.constant 0 : i32
    return %arg0, %c0_i32 : i32, i32
  }
  func.func @transform_2(%arg0: i32) -> (i32, i32) {
    %c0_i32 = arith.constant 0 : i32
    %c0_i32_0 = arith.constant 0 : i32
    %c0_i32_1 = arith.constant 0 : i32
    return %c0_i32, %c0_i32_0 : i32, i32
  }
  func.func @transform_3(%arg0: i32) -> (i32, i32) {
    %c0_i32 = arith.constant 0 : i32
    %c0_i32_0 = arith.constant 0 : i32
    %c0_i32_1 = arith.constant 0 : i32
    return %c0_i32, %c0_i32_0 : i32, i32
  }
  func.func @transform_4(%arg0: i32) -> (i32, i32) {
    %c0_i32 = arith.constant 0 : i32
    %c0_i32_0 = arith.constant 0 : i32
    return %arg0, %c0_i32 : i32, i32
  }
}

</mosaic_0001>

<llo_original>
// kernel: tpu_custom_call.1
$region0: #{tpu_custom_call.1}
  #allocation0 [shape = 'u32[]', space=smem, size = 0x4, offset = 0x4, fixed_abs, tag = 'smem constant byte address 0x4 - core index']
  #allocation1 [shape = 'u32[72,128]{1,0:T(1,128)}', space=vmem, size = 0x9000, scoped, tag = 'internal scratch']
  %s0 = inlined_call_operand.vmem [shape: bf16[16,64], index: 0, kind: input, shape index: {}]
  %s1 = inlined_call_operand.vmem [shape: f32[16,32], index: 1, kind: input, shape index: {}]
  %s2 = inlined_call_operand.vmem [shape: bf16[64,32], index: 2, kind: input, shape index: {}]
  %s3 = inlined_call_operand.vmem [shape: f32[3,32], index: 3, kind: input, shape index: {}]
  %s4 = inlined_call_operand.hbm [shape: bf16[16,32], index: 4, kind: output, shape index: {}]
  %s5 = sld [smem:[#allocation0]]
  $region49: #{tpu_custom_call.1} parent=0
    _
  %s7 = ssub.s32 1, %s5
  %s8 = scalar_select 0, %s7, %s5
  $region1: #{tpu_custom_call.1} parent=0
    #allocation2 [shape = 'u8[4096]{0}', space=vmem, size = 0x1000, scoped, tag = 'output window, operand 0']
    #allocation3 [shape = 's32[2]{0}', space=sflag, size = 0x8, scoped, tag = 'scoped memory for tpu_custom_call.1']
    %9 = vsyncpa [#allocation3], 0
    %s10 = scalar_lea.sflag [#allocation3], 1
    %11 = vsyncpa %s10, 0
    loop: start=0, step=1, limit=4
    $region2: #{tpu_custom_call.1} parent=1 // loop_pre_header
      _
    $region3: #{tpu_custom_call.1} parent=1 // loop_header
      %s13 = sphi 0, %s17
      %p14 = scmp.ge.s32.totalorder %s13, 4
      %s23 = sphi 0, %s25
      %s26 = sphi 0, %s23
      %s27 = sphi 0, %s26
      %s43 = sphi 0, %s27
      %s49 = sphi 0, %s51
      %s52 = sphi 0, %s49
      %s53 = sphi 0, %s52
      %s69 = sphi 0, %s53
      %s73 = sphi 0, %s73
      %s75 = sphi 0, %s73
      %s76 = sphi 0, %s75
      %s90 = sphi 0, %s76
      %s94 = sphi 0, %s94
      %s96 = sphi 0, %s94
      %s97 = sphi 0, %s96
      %s111 = sphi 0, %s97
      %s117 = sphi 0, %s119
      %s120 = sphi 0, %s117
      %s121 = sphi 0, %s120
      %s137 = sphi 0, %s121
    $region4: #{tpu_custom_call.1} parent=1 // loop_header_branch
      %16 = sbr.rel (%p14) target = $region8
    $region5: #{tpu_custom_call.1} parent=1 // loop_body
      %s18 = ssub.s32 %s13, 1
      %s19 = ssub.s32 %s13, 2
      %s20 = sadd.s32 %s13, 1
      %s21 = ssub.s32 %s13, %s20
      %p22 = scmp.eq.s32.totalorder %s21, 0
      %s24 = sadd.s32 %s23, 1
      %s25 = scalar_select %p22, %s23, %s24
      %p28 = pneg %p22
      %p29 = scmp.eq.s32.totalorder %s13, 1
      %p30 = por %p28, %p29
      %p31 = scmp.ne.s32.totalorder %s23, %s26
      %p32 = scmp.eq.s32.totalorder %s13, 0
      %p33 = por %p31, %p32
      %p34 = scmp.ne.s32.totalorder %s23, %s26
      %p35 = scmp.eq.s32.totalorder %s18, 1
      %p36 = por %p34, %p35
      %p37 = scmp.ne.s32.totalorder %s26, %s27
      %p38 = scmp.eq.s32.totalorder %s18, 0
      %p39 = por %p37, %p38
      %p40 = scmp.ne.s32.totalorder %s26, %s27
      %p41 = scmp.eq.s32.totalorder %s19, 1
      %p42 = por %p40, %p41
      %p44 = scmp.ne.s32.totalorder %s27, %s43
      %p45 = scmp.eq.s32.totalorder %s19, 0
      %p46 = por %p44, %p45
      %s47 = ssub.s32 %s13, %s20
      %p48 = scmp.eq.s32.totalorder %s47, 0
      %s50 = sadd.s32 %s49, 1
      %s51 = scalar_select %p48, %s49, %s50
      %p54 = pneg %p48
      %p55 = scmp.eq.s32.totalorder %s13, 1
      %p56 = por %p54, %p55
      %p57 = scmp.ne.s32.totalorder %s49, %s52
      %p58 = scmp.eq.s32.totalorder %s13, 0
      %p59 = por %p57, %p58
      %p60 = scmp.ne.s32.totalorder %s49, %s52
      %p61 = scmp.eq.s32.totalorder %s18, 1
      %p62 = por %p60, %p61
      %p63 = scmp.ne.s32.totalorder %s52, %s53
      %p64 = scmp.eq.s32.totalorder %s18, 0
      %p65 = por %p63, %p64
      %p66 = scmp.ne.s32.totalorder %s52, %s53
      %p67 = scmp.eq.s32.totalorder %s19, 1
      %p68 = por %p66, %p67
      %p70 = scmp.ne.s32.totalorder %s53, %s69
      %p71 = scmp.eq.s32.totalorder %s19, 0
      %p72 = por %p70, %p71
      %s74 = sadd.s32 %s73, 1
      %p77 = scmp.eq.s32.totalorder %s13, 1
      %p78 = scmp.ne.s32.totalorder %s73, %s75
      %p79 = scmp.eq.s32.totalorder %s13, 0
      %p80 = por %p78, %p79
      %p81 = scmp.ne.s32.totalorder %s73, %s75
      %p82 = scmp.eq.s32.totalorder %s18, 1
      %p83 = por %p81, %p82
      %p84 = scmp.ne.s32.totalorder %s75, %s76
      %p85 = scmp.eq.s32.totalorder %s18, 0
      %p86 = por %p84, %p85
      %p87 = scmp.ne.s32.totalorder %s75, %s76
      %p88 = scmp.eq.s32.totalorder %s19, 1
      %p89 = por %p87, %p88
      %p91 = scmp.ne.s32.totalorder %s76, %s90
      %p92 = scmp.eq.s32.totalorder %s19, 0
      %p93 = por %p91, %p92
      %s95 = sadd.s32 %s94, 1
      %p98 = scmp.eq.s32.totalorder %s13, 1
      %p99 = scmp.ne.s32.totalorder %s94, %s96
      %p100 = scmp.eq.s32.totalorder %s13, 0
      %p101 = por %p99, %p100
      %p102 = scmp.ne.s32.totalorder %s94, %s96
      %p103 = scmp.eq.s32.totalorder %s18, 1
      %p104 = por %p102, %p103
      %p105 = scmp.ne.s32.totalorder %s96, %s97
      %p106 = scmp.eq.s32.totalorder %s18, 0
      %p107 = por %p105, %p106
      %p108 = scmp.ne.s32.totalorder %s96, %s97
      %p109 = scmp.eq.s32.totalorder %s19, 1
      %p110 = por %p108, %p109
      %p112 = scmp.ne.s32.totalorder %s97, %s111
      %p113 = scmp.eq.s32.totalorder %s19, 0
      %p114 = por %p112, %p113
      %s115 = ssub.s32 %s13, %s20
      %p116 = scmp.eq.s32.totalorder %s115, 0
      %s118 = sadd.s32 %s117, 1
      %s119 = scalar_select %p116, %s117, %s118
      %p122 = pneg %p116
      %p123 = scmp.eq.s32.totalorder %s13, 1
      %p124 = por %p122, %p123
      %p125 = scmp.ne.s32.totalorder %s117, %s120
      %p126 = scmp.eq.s32.totalorder %s13, 0
      %p127 = por %p125, %p126
      %p128 = scmp.ne.s32.totalorder %s117, %s120
      %p129 = scmp.eq.s32.totalorder %s18, 1
      %p130 = por %p128, %p129
      %p131 = scmp.ne.s32.totalorder %s120, %s121
      %p132 = scmp.eq.s32.totalorder %s18, 0
      %p133 = por %p131, %p132
      %p134 = scmp.ne.s32.totalorder %s120, %s121
      %p135 = scmp.eq.s32.totalorder %s19, 1
      %p136 = por %p134, %p135
      %p138 = scmp.ne.s32.totalorder %s121, %s137
      %p139 = scmp.eq.s32.totalorder %s19, 0
      %p140 = por %p138, %p139
      %p141 = scmp.le.s32.totalorder 1, %s13
      %p142 = scmp.lt.s32.totalorder %s13, 3
      %p143 = pnand %p141, %p142
      %p144 = pneg %p143
      // Predicated region
      $region9: #{tpu_custom_call.1} parent=5 // pred_check
        _
      $region10: #{tpu_custom_call.1} parent=5 // pred_check_branch
        %146 = sbr.rel (%p143) target = $region12
      $region11: #{tpu_custom_call.1} parent=5 // pred_region
        %s147 = ssub.s32 %s13, 1
        // Predicated region
        $region13: #{tpu_custom_call.1} parent=11 // pred_check
          %p148 = pneg %p86
        $region14: #{tpu_custom_call.1} parent=11 // pred_check_branch
          %150 = sbr.rel (%p148) target = $region16
        $region15: #{tpu_custom_call.1} parent=11 // pred_region
          _
        $region16: #{tpu_custom_call.1} parent=11 // pred_fallthru
          _
        // Predicated region
        $region17: #{tpu_custom_call.1} parent=11 // pred_check
          %p151 = pneg %p107
        $region18: #{tpu_custom_call.1} parent=11 // pred_check_branch
          %153 = sbr.rel (%p151) target = $region20
        $region19: #{tpu_custom_call.1} parent=11 // pred_region
          _
        $region20: #{tpu_custom_call.1} parent=11 // pred_fallthru
          _
      $region12: #{tpu_custom_call.1} parent=5 // pred_fallthru
        _
      %p154 = scmp.lt.s32.totalorder %s13, 2
      // Predicated region
      $region21: #{tpu_custom_call.1} parent=5 // pred_check
        %p155 = pneg %p154
      $region22: #{tpu_custom_call.1} parent=5 // pred_check_branch
        %157 = sbr.rel (%p155) target = $region24
      $region23: #{tpu_custom_call.1} parent=5 // pred_region
        // Predicated region
        $region25: #{tpu_custom_call.1} parent=23 // pred_check
          %p158 = pneg %p33
        $region26: #{tpu_custom_call.1} parent=23 // pred_check_branch
          %160 = sbr.rel (%p158) target = $region28
        $region27: #{tpu_custom_call.1} parent=23 // pred_region
          %p161 = scmp.lt.s32.totalorder %s13, 1
          %s162 = scalar_select %p161, %s13, 1
          %s163 = smul.addr %s162, 4
          %s164 = scalar_lea.vmem %s0, %s163
        $region28: #{tpu_custom_call.1} parent=23 // pred_fallthru
          _
        // Predicated region
        $region29: #{tpu_custom_call.1} parent=23 // pred_check
          %p165 = pneg %p59
        $region30: #{tpu_custom_call.1} parent=23 // pred_check_branch
          %167 = sbr.rel (%p165) target = $region32
        $region31: #{tpu_custom_call.1} parent=23 // pred_region
          %p168 = scmp.lt.s32.totalorder %s13, 1
          %s169 = scalar_select %p168, %s13, 1
          %s170 = smul.addr %s169, 8
          %s171 = scalar_lea.vmem %s1, %s170
        $region32: #{tpu_custom_call.1} parent=23 // pred_fallthru
          _
      $region24: #{tpu_custom_call.1} parent=5 // pred_fallthru
        _
      %p172 = scmp.le.s32.totalorder 1, %s13
      %p173 = scmp.lt.s32.totalorder %s13, 3
      %p174 = pnand %p172, %p173
      %p175 = pneg %p174
      // Predicated region
      $region33: #{tpu_custom_call.1} parent=5 // pred_check
        _
      $region34: #{tpu_custom_call.1} parent=5 // pred_check_branch
        %177 = sbr.rel (%p174) target = $region36
      $region35: #{tpu_custom_call.1} parent=5 // pred_region
        %s178 = ssub.s32 %s13, 1
        %p179 = scmp.lt.s32.totalorder %s18, 1
        %s180 = scalar_select %p179, %s18, 1
        %s181 = smul.addr %s180, 4
        %s182 = scalar_lea.vmem %s0, %s181
        %p183 = pneg %p39
        %p184 = pneg %p36
        %p185 = scmp.lt.s32.totalorder %s18, 1
        %s186 = scalar_select %p185, %s18, 1
        %s187 = smul.addr %s186, 8
        %s188 = scalar_lea.vmem %s1, %s187
        %p189 = pneg %p65
        %p190 = pneg %p62
        %p191 = pneg %p86
        %p192 = pneg %p83
        %p193 = pneg %p107
        %p194 = pneg %p104
        %p195 = pneg %p133
        %p196 = pneg %p130
        %s197 = sand.u32 %s120, 1
        %s198 = scalar_lea.sflag [#allocation3], %s197
        %s199 = sand.u32 %s120, 1
        %s200 = smul.addr %s199, 4
        %s201 = scalar_lea.vmem [#allocation2], %s200
        %p202 = scmp.lt.s32.totalorder %s18, 1
        %s203 = scalar_select %p202, %s18, 1
        %s204 = smul.addr %s203, 4
        %s205 = scalar_lea.vmem %s0, %s204
        %p206 = scmp.lt.s32.totalorder %s18, 1
        %s207 = scalar_select %p206, %s18, 1
        %s208 = smul.addr %s207, 8
        %s209 = scalar_lea.vmem %s1, %s208
        %v211 = vld [vmem:[%s205] sm:$0xf]
        %v212 = vld [vmem:[%s2] sm:$0xf]
        %v213 = vld [vmem:[%s2 + $0x4] sm:$0xf]
        %v214 = vld [vmem:[%s2 + $0x8] sm:$0xf]
        %v215 = vld [vmem:[%s2 + $0xc] sm:$0xf]
        %v216 = vld [vmem:[%s2 + $0x10] sm:$0xf]
        %v217 = vld [vmem:[%s2 + $0x14] sm:$0xf]
        %v218 = vld [vmem:[%s2 + $0x18] sm:$0xf]
        %v219 = vld [vmem:[%s2 + $0x1c] sm:$0xf]
        %v220 = vld [vmem:[%s3] sm:$0x1]
        %v221 = vperm.slane %v220, 0
        %v230 = vunpack.c.l.b16 %v212
        %v231 = vunpack.c.l.b16 %v213
        %v232 = vunpack.c.l.b16 %v214
        %v233 = vunpack.c.l.b16 %v215
        %v234 = vunpack.c.l.b16 %v216
        %v235 = vunpack.c.l.b16 %v217
        %v236 = vunpack.c.l.b16 %v218
        %v237 = vunpack.c.l.b16 %v219
        %v238 = vpack.c.b16 %v231, %v230
        %v239 = vpack.c.b16 %v233, %v232
        %v240 = vpack.c.b16 %v235, %v234
        %v241 = vpack.c.b16 %v237, %v236
        %vm246 = vcmask 523264
        %v248 = vsel %vm246, %v211, 0
        %250 = vmatpush.bf16.msra.mxu0 0
        %251 = vmatpush.bf16.msra.mxu0 0
        %252 = vmatpush.bf16.msra.mxu0 0
        %253 = vmatpush.bf16.msra.mxu0 0
        %254 = vmatpush.bf16.msra.mxu0 %v241
        %255 = vmatpush.bf16.msra.mxu0 %v240
        %256 = vmatpush.bf16.msra.mxu0 %v239
        %257 = vmatpush.bf16.msra.mxu0 %v238
        %258 = vmatmul.bf16.gmra.mxu0 %v248
        %v259 = vpop.f32.mrf.mxu0
        %v260 = vadd.f32 %v221, %v259
        %v261 = vpop.f32.mrf.mxu0
        %262 = vdwg.mxu0
        %v263 = vld [vmem:[%s209] sm:$0xff]
        %v264 = vadd.f32 %v260, %v263
        %vm265 = vcmask 261120
        %v266 = vsel %vm265, %v264, 0.0
        %267 = vadd.xlane.f32.xlu0 %v266
        %v268 = vpop.xlane.xlu0 %267
        %v269 = vrcp.pop 32.0
        %v270 = vmul.f32 32.0, %v269
        %v271 = vsub.f32 1.0, %v270
        %v272 = vmul.f32 %v269, %v271
        %v273 = vadd.f32 %v269, %v272
        %vm274 = vweird.f32 %v269
        %v275 = vsel %vm274, %v269, %v273
        %v276 = vmul.f32 %v268, %v275
        %v277 = vmul.f32 %v264, %v264
        %v278 = vsel %vm265, %v277, 0.0
        %279 = vadd.xlane.f32.xlu0 %v278
        %v280 = vpop.xlane.xlu0 %279
        %v281 = vmul.f32 %v280, %v275
        %v282 = vmul.f32 %v276, %v276
        %v283 = vsub.f32 %v281, %v282
        %v284 = vadd.f32 %v283, 1e-12
        %v285 = vrsqrt.pop %v284
        %v286 = vmul.f32 %v285, %v284
        %v287 = vmul.f32 %v286, %v285
        %v288 = vmul.f32 0.5, %v287
        %v289 = vsub.f32 1.5, %v288
        %v290 = vmul.f32 %v285, %v289
        %vm291 = vweird.f32 %v284
        %vm292 = vweird.f32 %v285
        %vm293 = vmor %vm291, %vm292
        %v294 = vsel %vm293, %v285, %v290
        %v295 = vsub.f32 %v264, %v276
        %v296 = vmul.f32 %v295, %v294
        %v297 = vld [vmem:[%s3 + $0x1] sm:$0x1]
        %v298 = vperm.slane %v297, 0
        %v299 = vmul.f32 %v296, %v298
        %v300 = vld [vmem:[%s3 + $0x2] sm:$0x1]
        %v301 = vperm.slane %v300, 0
        %v302 = vadd.f32 %v299, %v301
        %v303 = vpack.c.bf16 %v302, %v302
        %vm304 = vcmask 257024
        %305 = vst.msk [vmem:[%s201] sm:$0xf] %vm304, %v303
        %s306 = sand.u32 %s120, 1
        %s307 = scalar_lea.sflag [#allocation3], %s306
        %s308 = sand.u32 %s120, 1
        %s309 = smul.addr %s308, 4
        %s310 = scalar_lea.vmem [#allocation2], %s309
        // Predicated region
        $region37: #{tpu_custom_call.1} parent=35 // pred_check
          %p311 = pneg %p130
        $region38: #{tpu_custom_call.1} parent=35 // pred_check_branch
          %313 = sbr.rel (%p311) target = $region40
        $region39: #{tpu_custom_call.1} parent=35 // pred_region
          %315 = vsyncadd %s307, 0
          %s316 = smul.addr %s18, 4
          %s317 = scalar_lea.hbm %s4, %s316
          %s319 = sshll.u32 %s310, 4
          %s320 = int_to_ptr.vmem [resolvable:$true] %s319
          %s321 = sshll.u32 %s317, 4
          %s322 = int_to_ptr.hbm [resolvable:$true] %s321
          %324 = dma.vmem_to_hbm [thread:$0]  %s320, 64, %s322, %s307
        $region40: #{tpu_custom_call.1} parent=35 // pred_fallthru
          _
      $region36: #{tpu_custom_call.1} parent=5 // pred_fallthru
        _
      %p325 = scmp.le.s32.totalorder 2, %s13
      // Predicated region
      $region41: #{tpu_custom_call.1} parent=5 // pred_check
        %p326 = pneg %p325
      $region42: #{tpu_custom_call.1} parent=5 // pred_check_branch
        %328 = sbr.rel (%p326) target = $region44
      $region43: #{tpu_custom_call.1} parent=5 // pred_region
        %s329 = ssub.s32 %s13, 2
        // Predicated region
        $region45: #{tpu_custom_call.1} parent=43 // pred_check
          %p330 = pneg %p136
        $region46: #{tpu_custom_call.1} parent=43 // pred_check_branch
          %332 = sbr.rel (%p330) target = $region48
        $region47: #{tpu_custom_call.1} parent=43 // pred_region
          %s333 = sand.u32 %s121, 1
          %s334 = scalar_lea.sflag [#allocation3], %s333
          %s335 = sand.u32 %s121, 1
          %s336 = smul.addr %s335, 4
          %s337 = scalar_lea.vmem [#allocation2], %s336
          %339 = dma.done %s334, 64
        $region48: #{tpu_custom_call.1} parent=43 // pred_fallthru
          _
      $region44: #{tpu_custom_call.1} parent=5 // pred_fallthru
        _
    $region6: #{tpu_custom_call.1} parent=1 // loop_footer
      %s17 = sadd.s32 1, %s13
    $region7: #{tpu_custom_call.1} parent=1 // loop_footer_branch
      %12 = sbr.rel target = $region3
    $region8: #{tpu_custom_call.1} parent=1 // loop_exit
      _
    %340 = vsyncpa [#allocation3], 1
    %s341 = scalar_lea.sflag [#allocation3], 1
    %342 = vsyncpa %s341, 1

</llo_original>
